<compile_context>
chip_gen: v5e
topology: v5e:2x2
jax: 0.10.0
libtpu: 0.0.40
codegen_flags: <defaults>
</compile_context>

<pallas_src>
import functools

import jax
import jax.numpy as jnp
from jax.experimental import pallas as pl
from jax.experimental.pallas import tpu as pltpu

EPS = 1e-5                       # torch.nn.InstanceNorm1d default
TARGET_BLOCK_BYTES = 8 << 20     # ~8 MiB x-block -> ~32 MiB double-buffered in+out
VMEM_LIMIT_BYTES = 48 * 1024 * 1024  # headroom on v7x (64 MiB phys), fine on v5e/v6e


# ---------------------------------------------------------------------------
# Single-pass kernel: the whole (1, TC, L) row tile is resident in VMEM.
# ---------------------------------------------------------------------------
def _instance_norm_kernel(x_ref, w_ref, b_ref, o_ref, *, inv_len):
    # x_ref: (1, TC, L); w_ref / b_ref: (1, TC, 1) f32; o_ref like x_ref.
    x = x_ref[...].astype(jnp.float32)
    mean = jnp.sum(x, axis=-1, keepdims=True) * inv_len            # (1, TC, 1)
    xc = x - mean
    var = jnp.sum(xc * xc, axis=-1, keepdims=True) * inv_len       # centered -> no cancellation
    a = w_ref[...] * jax.lax.rsqrt(var + EPS)                      # (1, TC, 1)
    o_ref[...] = (xc * a + b_ref[...]).astype(o_ref.dtype)


# ---------------------------------------------------------------------------
# Two-pass kernels for very long L (L tiled on a trailing "arbitrary" axis).
# ---------------------------------------------------------------------------
def _stats_kernel(x_ref, sum_ref, sq_ref, *, true_len, tile_len):
    l = pl.program_id(2)

    @pl.when(l == 0)
    def _():
        sum_ref[...] = jnp.zeros_like(sum_ref)
        sq_ref[...] = jnp.zeros_like(sq_ref)

    x = x_ref[...].astype(jnp.float32)                             # (1, TC, TL)
    # Mask the (possibly partial / garbage-filled) last tile explicitly.
    idx = jax.lax.broadcasted_iota(jnp.int32, x.shape, dimension=2) + l * tile_len
    x = jnp.where(idx < true_len, x, 0.0)
    sum_ref[...] += jnp.sum(x, axis=-1, keepdims=True)
    sq_ref[...] += jnp.sum(x * x, axis=-1, keepdims=True)


def _apply_kernel(x_ref, a_ref, b_ref, o_ref):
    # y = x * a + b ; out-of-bounds lanes of the last partial block are dropped
    # by Pallas on writeback.
    o_ref[...] = (x_ref[...].astype(jnp.float32) * a_ref[...] + b_ref[...]).astype(o_ref.dtype)


# ---------------------------------------------------------------------------
# Tile selection
# ---------------------------------------------------------------------------
def _choose_tiles(N, C, L, itemsize, target_block_bytes):
    """Returns (TC, TL). TL is None for the single-pass (full-L-resident) path."""
    def fits(tc, tl):
        return tc * tl * itemsize <= target_block_bytes

    # Channel-tile candidates: the block's second-to-last dim must be a multiple
    # of 8 or equal the full C.
    if C % 8 == 0:
        cands = [tc for tc in range(8, C + 1, 8) if C % tc == 0]
    else:
        cands = [C]

    fitting = [tc for tc in cands if fits(tc, L)]
    if fitting:
        tc = max(fitting)
        # Keep both TensorCores of a 2-TC chip fed if the grid would be 1 step.
        if N == 1 and tc == C:
            smaller = [t for t in fitting if t < C]
            if smaller:
                tc = max(smaller)
        return tc, None

    # Long-L fallback: smallest legal channel tile + L tiling (two-pass).
    tc = min(cands)
    tl = max(128, (target_block_bytes // (tc * itemsize)) // 128 * 128)
    tl = min(tl, pl.cdiv(L, 128) * 128)
    return tc, int(tl)


# ---------------------------------------------------------------------------
# Wrapper
# ---------------------------------------------------------------------------
def instance_norm_eeg(x, weight, bias, *, channel_tile=None, length_tile=None,
                      target_block_bytes=TARGET_BLOCK_BYTES):
    """torch.nn.InstanceNorm1d(C, affine=True) forward.
    x: (N, C, L); weight, bias: (C,).  Returns (N, C, L)."""
    N, C, L = x.shape
    itemsize = jnp.dtype(x.dtype).itemsize

    auto_tc, auto_tl = _choose_tiles(N, C, L, itemsize, target_block_bytes)
    TC = channel_tile if channel_tile is not None else auto_tc
    TL = length_tile if length_tile is not None else auto_tl

    assert C % TC == 0 and (TC % 8 == 0 or TC == C), (C, TC)
    assert TL is None or (TL > 0 and TL % 128 == 0), TL

    w = weight.reshape(1, C, 1).astype(jnp.float32)
    b = bias.reshape(1, C, 1).astype(jnp.float32)

    if TL is None:
        # ---- single pass: full L resident per (n, channel-tile) ----
        kernel = functools.partial(_instance_norm_kernel, inv_len=1.0 / float(L))
        return pl.pallas_call(
            kernel,
            out_shape=jax.ShapeDtypeStruct((N, C, L), x.dtype),
            grid_spec=pltpu.PrefetchScalarGridSpec(
                num_scalar_prefetch=0,
                grid=(C // TC, N),  # N innermost -> gamma/beta DMA skipped per step
                in_specs=[
                    pl.BlockSpec((1, TC, L), lambda c, n: (n, c, 0)),
                    pl.BlockSpec((1, TC, 1), lambda c, n: (0, c, 0)),
                    pl.BlockSpec((1, TC, 1), lambda c, n: (0, c, 0)),
                ],
                out_specs=pl.BlockSpec((1, TC, L), lambda c, n: (n, c, 0)),
            ),
            compiler_params=pltpu.CompilerParams(
                dimension_semantics=("parallel", "parallel"),
                vmem_limit_bytes=VMEM_LIMIT_BYTES,
            ),
        )(x, w, b)

    # ---- two-pass: stats over tiled L, then apply ----
    nL = pl.cdiv(L, TL)

    stats_kernel = functools.partial(_stats_kernel, true_len=L, tile_len=TL)
    s, sq = pl.pallas_call(
        stats_kernel,
        out_shape=(jax.ShapeDtypeStruct((N, C, 1), jnp.float32),
                   jax.ShapeDtypeStruct((N, C, 1), jnp.float32)),
        grid_spec=pltpu.PrefetchScalarGridSpec(
            num_scalar_prefetch=0,
            grid=(C // TC, N, nL),
            in_specs=[pl.BlockSpec((1, TC, TL), lambda c, n, l: (n, c, l))],
            out_specs=(pl.BlockSpec((1, TC, 1), lambda c, n, l: (n, c, 0)),
                       pl.BlockSpec((1, TC, 1), lambda c, n, l: (n, c, 0))),
        ),
        compiler_params=pltpu.CompilerParams(
            dimension_semantics=("parallel", "parallel", "arbitrary"),
            vmem_limit_bytes=VMEM_LIMIT_BYTES,
        ),
    )(x)

    # Tiny (N, C, 1) math: fold normalize + affine into y = x*a + b_hat.
    inv_len = 1.0 / float(L)
    mean = s * inv_len
    var = jnp.maximum(sq * inv_len - mean * mean, 0.0)
    a = w * jax.lax.rsqrt(var + EPS)      # (N, C, 1) via broadcast
    b_hat = b - mean * a                  # (N, C, 1)

    return pl.pallas_call(
        _apply_kernel,
        out_shape=jax.ShapeDtypeStruct((N, C, L), x.dtype),
        grid_spec=pltpu.PrefetchScalarGridSpec(
            num_scalar_prefetch=0,
            grid=(C // TC, N, nL),
            in_specs=[
                pl.BlockSpec((1, TC, TL), lambda c, n, l: (n, c, l)),
                pl.BlockSpec((1, TC, 1), lambda c, n, l: (n, c, 0)),
                pl.BlockSpec((1, TC, 1), lambda c, n, l: (n, c, 0)),
            ],
            out_specs=pl.BlockSpec((1, TC, TL), lambda c, n, l: (n, c, l)),
        ),
        compiler_params=pltpu.CompilerParams(
            dimension_semantics=("parallel", "parallel", "parallel"),
            vmem_limit_bytes=VMEM_LIMIT_BYTES,
        ),
    )(x, a, b_hat)


# ---------------------------------------------------------------------------
# Reference + tests
# ---------------------------------------------------------------------------
def _reference(x, weight, bias):
    xf = x.astype(jnp.float32)
    mean = jnp.mean(xf, axis=-1, keepdims=True)
    var = jnp.mean((xf - mean) ** 2, axis=-1, keepdims=True)
    y = (xf - mean) * jax.lax.rsqrt(var + EPS)
    return (y * weight.reshape(1, -1, 1) + bias.reshape(1, -1, 1)).astype(x.dtype)


if __name__ == "__main__":
    key = jax.random.PRNGKey(0)

    # Case 1: module-sized example (N=2, C=4, L=16); C%8!=0 -> full-C block,
    #         L != multiple of 128 -> exercises the no-pad / full-L-block path.
    # Case 2: forces channel tiling (C=16, TC=8 -> grid=(2, 2)), L=200.
    # Case 3: forces the long-L two-pass fallback (L=300, TL=128 -> partial last
    #         L-tile exercises the in-kernel iota mask and clipped writeback).
    cases = [
        dict(N=2, C=4, L=16, channel_tile=None, length_tile=None),
        dict(N=2, C=16, L=200, channel_tile=8, length_tile=None),
        dict(N=1, C=4, L=300, channel_tile=None, length_tile=128),
    ]

    for idx, cfg in enumerate(cases):
        k_x, k_w, k_b, key = jax.random.split(key, 4)
        N, C, L = cfg["N"], cfg["C"], cfg["L"]

        x = jax.random.normal(k_x, (N, C, L), dtype=jnp.float32)
        # torch default affine init is ones/zeros; perturb so the affine path
        # is actually exercised.
        weight = 1.0 + 0.1 * jax.random.normal(k_w, (C,), dtype=jnp.float32)
        bias = 0.1 * jax.random.normal(k_b, (C,), dtype=jnp.float32)

        out = instance_norm_eeg(x, weight, bias,
                                channel_tile=cfg["channel_tile"],
                                length_tile=cfg["length_tile"])
        out = jax.block_until_ready(out)

        ref = _reference(x, weight, bias)
        assert out.shape == (N, C, L), f"shape mismatch case {idx}"
        assert jnp.allclose(out, ref, atol=1e-4, rtol=1e-4), f"mismatch case {idx}"

    print("KERNEL_OK")
</pallas_src>

<mosaic_0001>
module attributes {stable_mosaic.version = 11 : i64} {
  func.func @_instance_norm_kernel(%arg0: i32, %arg1: i32, %arg2: memref<1x4x16xf32, #tpu.memory_space<vmem>>, %arg3: memref<1x4x1xf32, #tpu.memory_space<vmem>>, %arg4: memref<1x4x1xf32, #tpu.memory_space<vmem>>, %arg5: memref<1x4x16xf32, #tpu.memory_space<vmem>>) attributes {dimension_semantics = [#tpu.dimension_semantics<parallel>, #tpu.dimension_semantics<parallel>], iteration_bounds = array<i64: 1, 2>, scalar_prefetch = 0 : i64, scratch_operands = 0 : i64, tpu.core_type = #tpu.core_type<tc>, window_params = [{transform_indices = @transform_0, window_bounds = array<i64: 1, 4, 16>}, {transform_indices = @transform_1, window_bounds = array<i64: 1, 4, 1>}, {transform_indices = @transform_2, window_bounds = array<i64: 1, 4, 1>}, {transform_indices = @transform_3, window_bounds = array<i64: 1, 4, 16>}]} {
    %c0 = arith.constant 0 : index
    %c0_0 = arith.constant 0 : index
    %c0_1 = arith.constant 0 : index
    %0 = vector.load %arg2[%c0, %c0_0, %c0_1] : memref<1x4x16xf32, #tpu.memory_space<vmem>>, vector<1x4x16xf32>
    %cst = arith.constant dense<0.000000e+00> : vector<1x4xf32>
    %1 = vector.multi_reduction <add>, %0, %cst [2] : vector<1x4x16xf32> to vector<1x4xf32>
    %2 = vector.shape_cast %1 : vector<1x4xf32> to vector<1x4x1xf32>
    %cst_2 = arith.constant 6.250000e-02 : f32
    %3 = vector.broadcast %cst_2 : f32 to vector<1x4x1xf32>
    %4 = arith.mulf %2, %3 : vector<1x4x1xf32>
    %5 = vector.broadcast %4 : vector<1x4x1xf32> to vector<1x4x16xf32>
    %6 = arith.subf %0, %5 : vector<1x4x16xf32>
    %7 = arith.mulf %6, %6 : vector<1x4x16xf32>
    %cst_3 = arith.constant dense<0.000000e+00> : vector<1x4xf32>
    %8 = vector.multi_reduction <add>, %7, %cst_3 [2] : vector<1x4x16xf32> to vector<1x4xf32>
    %9 = vector.shape_cast %8 : vector<1x4xf32> to vector<1x4x1xf32>
    %cst_4 = arith.constant 6.250000e-02 : f32
    %10 = vector.broadcast %cst_4 : f32 to vector<1x4x1xf32>
    %11 = arith.mulf %9, %10 : vector<1x4x1xf32>
    %c0_5 = arith.constant 0 : index
    %c0_6 = arith.constant 0 : index
    %c0_7 = arith.constant 0 : index
    %12 = vector.load %arg3[%c0_5, %c0_6, %c0_7] : memref<1x4x1xf32, #tpu.memory_space<vmem>>, vector<1x4x1xf32>
    %cst_8 = arith.constant 9.99999974E-6 : f32
    %13 = vector.broadcast %cst_8 : f32 to vector<1x4x1xf32>
    %14 = arith.addf %11, %13 : vector<1x4x1xf32>
    %15 = math.rsqrt %14 : vector<1x4x1xf32>
    %16 = arith.mulf %12, %15 : vector<1x4x1xf32>
    %17 = vector.broadcast %16 : vector<1x4x1xf32> to vector<1x4x16xf32>
    %18 = arith.mulf %6, %17 : vector<1x4x16xf32>
    %c0_9 = arith.constant 0 : index
    %c0_10 = arith.constant 0 : index
    %c0_11 = arith.constant 0 : index
    %19 = vector.load %arg4[%c0_9, %c0_10, %c0_11] : memref<1x4x1xf32, #tpu.memory_space<vmem>>, vector<1x4x1xf32>
    %20 = vector.broadcast %19 : vector<1x4x1xf32> to vector<1x4x16xf32>
    %21 = arith.addf %18, %20 : vector<1x4x16xf32>
    %c0_12 = arith.constant 0 : index
    %c0_13 = arith.constant 0 : index
    %c0_14 = arith.constant 0 : index
    %22 = vector.load %arg5[%c0_12, %c0_13, %c0_14] : memref<1x4x16xf32, #tpu.memory_space<vmem>>, vector<1x4x16xf32>
    tpu.vector_store %arg5[%c0_12, %c0_13, %c0_14], %21 {strides = array<i32>} : memref<1x4x16xf32, #tpu.memory_space<vmem>>, vector<1x4x16xf32>,
    return
  }
  func.func @transform_0(%arg0: i32, %arg1: i32) -> (i32, i32, i32) {
    %c0_i32 = arith.constant 0 : i32
    %c0_i32_0 = arith.constant 0 : i32
    return %arg1, %arg0, %c0_i32 : i32, i32, i32
  }
  func.func @transform_1(%arg0: i32, %arg1: i32) -> (i32, i32, i32) {
    %c0_i32 = arith.constant 0 : i32
    %c0_i32_0 = arith.constant 0 : i32
    %c0_i32_1 = arith.constant 0 : i32
    return %c0_i32, %arg0, %c0_i32_0 : i32, i32, i32
  }
  func.func @transform_2(%arg0: i32, %arg1: i32) -> (i32, i32, i32) {
    %c0_i32 = arith.constant 0 : i32
    %c0_i32_0 = arith.constant 0 : i32
    %c0_i32_1 = arith.constant 0 : i32
    return %c0_i32, %arg0, %c0_i32_0 : i32, i32, i32
  }
  func.func @transform_3(%arg0: i32, %arg1: i32) -> (i32, i32, i32) {
    %c0_i32 = arith.constant 0 : i32
    %c0_i32_0 = arith.constant 0 : i32
    return %arg1, %arg0, %c0_i32 : i32, i32, i32
  }
}

</mosaic_0001>

<llo_original>
// kernel: tpu_custom_call.1
$region0: #{tpu_custom_call.1}
  #allocation0 [shape = 'u32[]', space=smem, size = 0x4, offset = 0x4, fixed_abs, tag = 'smem constant byte address 0x4 - core index']
  #allocation1 [shape = 'u32[72,128]{1,0:T(1,128)}', space=vmem, size = 0x9000, scoped, tag = 'internal scratch']
  %s0 = inlined_call_operand.vmem [shape: f32[2,4,16], index: 0, kind: input, shape index: {}]
  %s1 = inlined_call_operand.vmem [shape: f32[1,4,1], index: 1, kind: input, shape index: {}]
  %s2 = inlined_call_operand.vmem [shape: f32[1,4,1], index: 2, kind: input, shape index: {}]
  %s3 = inlined_call_operand.hbm [shape: f32[2,4,16], index: 3, kind: output, shape index: {}]
  %s4 = sld [smem:[#allocation0]]
  $region45: #{tpu_custom_call.1} parent=0
    _
  %s6 = ssub.s32 1, %s4
  %s7 = scalar_select 0, %s6, %s4
  $region1: #{tpu_custom_call.1} parent=0
    #allocation2 [shape = 'u8[4096]{0}', space=vmem, size = 0x1000, scoped, tag = 'output window, operand 0']
    #allocation3 [shape = 's32[2]{0}', space=sflag, size = 0x8, scoped, tag = 'scoped memory for tpu_custom_call.1']
    %8 = vsyncpa [#allocation3], 0
    %s9 = scalar_lea.sflag [#allocation3], 1
    %10 = vsyncpa %s9, 0
    loop: start=0, step=1, limit=4
    $region2: #{tpu_custom_call.1} parent=1 // loop_pre_header
      _
    $region3: #{tpu_custom_call.1} parent=1 // loop_header
      %s12 = sphi 0, %s16
      %p13 = scmp.ge.s32.totalorder %s12, 4
      %s19 = sphi 0, %s31
      %s20 = sphi 0, %s27
      %s21 = sphi 0, %s19
      %s22 = sphi 0, %s20
      %s23 = sphi 0, %s21
      %s24 = sphi 0, %s22
      %s36 = sphi 0, %s38
      %s39 = sphi 0, %s36
      %s40 = sphi 0, %s39
      %s56 = sphi 0, %s40
      %s62 = sphi 0, %s64
      %s65 = sphi 0, %s62
      %s66 = sphi 0, %s65
      %s82 = sphi 0, %s66
      %s88 = sphi 0, %s90
      %s91 = sphi 0, %s88
      %s92 = sphi 0, %s91
      %s108 = sphi 0, %s92
      %s116 = sphi 0, %s118
      %s119 = sphi 0, %s116
      %s120 = sphi 0, %s119
      %s136 = sphi 0, %s120
    $region4: #{tpu_custom_call.1} parent=1 // loop_header_branch
      %15 = sbr.rel (%p13) target = $region8
    $region5: #{tpu_custom_call.1} parent=1 // loop_body
      %s17 = ssub.s32 %s12, 1
      %s18 = ssub.s32 %s12, 2
      %s25 = sadd.s32 1, %s20
      %p26 = scmp.ge.s32.totalorder %s25, 2
      %s27 = scalar_select %p26, 0, %s25
      %s28 = sadd.s32 1, %s19
      %s29 = scalar_select %p26, %s28, %s19
      %p30 = scmp.ge.s32.totalorder %s29, 1
      %s31 = scalar_select %p30, 0, %s29
      %s32 = ssub.s32 %s20, %s27
      %s33 = ssub.s32 %s19, %s31
      %s34 = sor.u32 %s32, %s33
      %p35 = scmp.eq.s32.totalorder %s34, 0
      %s37 = sadd.s32 %s36, 1
      %s38 = scalar_select %p35, %s36, %s37
      %p41 = pneg %p35
      %p42 = scmp.eq.s32.totalorder %s12, 1
      %p43 = por %p41, %p42
      %p44 = scmp.ne.s32.totalorder %s36, %s39
      %p45 = scmp.eq.s32.totalorder %s12, 0
      %p46 = por %p44, %p45
      %p47 = scmp.ne.s32.totalorder %s36, %s39
      %p48 = scmp.eq.s32.totalorder %s17, 1
      %p49 = por %p47, %p48
      %p50 = scmp.ne.s32.totalorder %s39, %s40
      %p51 = scmp.eq.s32.totalorder %s17, 0
      %p52 = por %p50, %p51
      %p53 = scmp.ne.s32.totalorder %s39, %s40
      %p54 = scmp.eq.s32.totalorder %s18, 1
      %p55 = por %p53, %p54
      %p57 = scmp.ne.s32.totalorder %s40, %s56
      %p58 = scmp.eq.s32.totalorder %s18, 0
      %p59 = por %p57, %p58
      %s60 = ssub.s32 %s19, %s31
      %p61 = scmp.eq.s32.totalorder %s60, 0
      %s63 = sadd.s32 %s62, 1
      %s64 = scalar_select %p61, %s62, %s63
      %p67 = pneg %p61
      %p68 = scmp.eq.s32.totalorder %s12, 1
      %p69 = por %p67, %p68
      %p70 = scmp.ne.s32.totalorder %s62, %s65
      %p71 = scmp.eq.s32.totalorder %s12, 0
      %p72 = por %p70, %p71
      %p73 = scmp.ne.s32.totalorder %s62, %s65
      %p74 = scmp.eq.s32.totalorder %s17, 1
      %p75 = por %p73, %p74
      %p76 = scmp.ne.s32.totalorder %s65, %s66
      %p77 = scmp.eq.s32.totalorder %s17, 0
      %p78 = por %p76, %p77
      %p79 = scmp.ne.s32.totalorder %s65, %s66
      %p80 = scmp.eq.s32.totalorder %s18, 1
      %p81 = por %p79, %p80
      %p83 = scmp.ne.s32.totalorder %s66, %s82
      %p84 = scmp.eq.s32.totalorder %s18, 0
      %p85 = por %p83, %p84
      %s86 = ssub.s32 %s19, %s31
      %p87 = scmp.eq.s32.totalorder %s86, 0
      %s89 = sadd.s32 %s88, 1
      %s90 = scalar_select %p87, %s88, %s89
      %p93 = pneg %p87
      %p94 = scmp.eq.s32.totalorder %s12, 1
      %p95 = por %p93, %p94
      %p96 = scmp.ne.s32.totalorder %s88, %s91
      %p97 = scmp.eq.s32.totalorder %s12, 0
      %p98 = por %p96, %p97
      %p99 = scmp.ne.s32.totalorder %s88, %s91
      %p100 = scmp.eq.s32.totalorder %s17, 1
      %p101 = por %p99, %p100
      %p102 = scmp.ne.s32.totalorder %s91, %s92
      %p103 = scmp.eq.s32.totalorder %s17, 0
      %p104 = por %p102, %p103
      %p105 = scmp.ne.s32.totalorder %s91, %s92
      %p106 = scmp.eq.s32.totalorder %s18, 1
      %p107 = por %p105, %p106
      %p109 = scmp.ne.s32.totalorder %s92, %s108
      %p110 = scmp.eq.s32.totalorder %s18, 0
      %p111 = por %p109, %p110
      %s112 = ssub.s32 %s20, %s27
      %s113 = ssub.s32 %s19, %s31
      %s114 = sor.u32 %s112, %s113
      %p115 = scmp.eq.s32.totalorder %s114, 0
      %s117 = sadd.s32 %s116, 1
      %s118 = scalar_select %p115, %s116, %s117
      %p121 = pneg %p115
      %p122 = scmp.eq.s32.totalorder %s12, 1
      %p123 = por %p121, %p122
      %p124 = scmp.ne.s32.totalorder %s116, %s119
      %p125 = scmp.eq.s32.totalorder %s12, 0
      %p126 = por %p124, %p125
      %p127 = scmp.ne.s32.totalorder %s116, %s119
      %p128 = scmp.eq.s32.totalorder %s17, 1
      %p129 = por %p127, %p128
      %p130 = scmp.ne.s32.totalorder %s119, %s120
      %p131 = scmp.eq.s32.totalorder %s17, 0
      %p132 = por %p130, %p131
      %p133 = scmp.ne.s32.totalorder %s119, %s120
      %p134 = scmp.eq.s32.totalorder %s18, 1
      %p135 = por %p133, %p134
      %p137 = scmp.ne.s32.totalorder %s120, %s136
      %p138 = scmp.eq.s32.totalorder %s18, 0
      %p139 = por %p137, %p138
      %p140 = scmp.le.s32.totalorder 1, %s12
      %p141 = scmp.lt.s32.totalorder %s12, 3
      %p142 = pnand %p140, %p141
      %p143 = pneg %p142
      // Predicated region
      $region9: #{tpu_custom_call.1} parent=5 // pred_check
        _
      $region10: #{tpu_custom_call.1} parent=5 // pred_check_branch
        %145 = sbr.rel (%p142) target = $region12
      $region11: #{tpu_custom_call.1} parent=5 // pred_region
        %s146 = ssub.s32 %s12, 1
        // Predicated region
        $region13: #{tpu_custom_call.1} parent=11 // pred_check
          %p147 = pneg %p78
        $region14: #{tpu_custom_call.1} parent=11 // pred_check_branch
          %149 = sbr.rel (%p147) target = $region16
        $region15: #{tpu_custom_call.1} parent=11 // pred_region
          %p150 = scmp.lt.s32.totalorder %s21, 0
          %s151 = scalar_select %p150, %s21, 0
          %s152 = smul.addr %s151, 4
          %s153 = scalar_lea.vmem %s1, %s152
        $region16: #{tpu_custom_call.1} parent=11 // pred_fallthru
          _
        // Predicated region
        $region17: #{tpu_custom_call.1} parent=11 // pred_check
          %p154 = pneg %p104
        $region18: #{tpu_custom_call.1} parent=11 // pred_check_branch
          %156 = sbr.rel (%p154) target = $region20
        $region19: #{tpu_custom_call.1} parent=11 // pred_region
          %p157 = scmp.lt.s32.totalorder %s21, 0
          %s158 = scalar_select %p157, %s21, 0
          %s159 = smul.addr %s158, 4
          %s160 = scalar_lea.vmem %s2, %s159
        $region20: #{tpu_custom_call.1} parent=11 // pred_fallthru
          _
      $region12: #{tpu_custom_call.1} parent=5 // pred_fallthru
        _
      %p161 = scmp.lt.s32.totalorder %s12, 2
      // Predicated region
      $region21: #{tpu_custom_call.1} parent=5 // pred_check
        %p162 = pneg %p161
      $region22: #{tpu_custom_call.1} parent=5 // pred_check_branch
        %164 = sbr.rel (%p162) target = $region24
      $region23: #{tpu_custom_call.1} parent=5 // pred_region
        // Predicated region
        $region25: #{tpu_custom_call.1} parent=23 // pred_check
          %p165 = pneg %p46
        $region26: #{tpu_custom_call.1} parent=23 // pred_check_branch
          %167 = sbr.rel (%p165) target = $region28
        $region27: #{tpu_custom_call.1} parent=23 // pred_region
          %p168 = scmp.lt.s32.totalorder %s20, 1
          %s169 = scalar_select %p168, %s20, 1
          %p170 = scmp.lt.s32.totalorder %s19, 0
          %s171 = scalar_select %p170, %s19, 0
          %s172 = sadd.s32 %s171, %s169
          %s173 = smul.addr %s172, 4
          %s174 = scalar_lea.vmem %s0, %s173
        $region28: #{tpu_custom_call.1} parent=23 // pred_fallthru
          _
      $region24: #{tpu_custom_call.1} parent=5 // pred_fallthru
        _
      %p175 = scmp.le.s32.totalorder 1, %s12
      %p176 = scmp.lt.s32.totalorder %s12, 3
      %p177 = pnand %p175, %p176
      %p178 = pneg %p177
      // Predicated region
      $region29: #{tpu_custom_call.1} parent=5 // pred_check
        _
      $region30: #{tpu_custom_call.1} parent=5 // pred_check_branch
        %180 = sbr.rel (%p177) target = $region32
      $region31: #{tpu_custom_call.1} parent=5 // pred_region
        %s181 = ssub.s32 %s12, 1
        %p182 = scmp.lt.s32.totalorder %s22, 1
        %s183 = scalar_select %p182, %s22, 1
        %p184 = scmp.lt.s32.totalorder %s21, 0
        %s185 = scalar_select %p184, %s21, 0
        %s186 = sadd.s32 %s185, %s183
        %s187 = smul.addr %s186, 4
        %s188 = scalar_lea.vmem %s0, %s187
        %p189 = pneg %p52
        %p190 = pneg %p49
        %p191 = scmp.lt.s32.totalorder %s21, 0
        %s192 = scalar_select %p191, %s21, 0
        %s193 = smul.addr %s192, 4
        %s194 = scalar_lea.vmem %s1, %s193
        %p195 = pneg %p78
        %p196 = pneg %p75
        %p197 = scmp.lt.s32.totalorder %s21, 0
        %s198 = scalar_select %p197, %s21, 0
        %s199 = smul.addr %s198, 4
        %s200 = scalar_lea.vmem %s2, %s199
        %p201 = pneg %p104
        %p202 = pneg %p101
        %p203 = pneg %p132
        %p204 = pneg %p129
        %s205 = sand.u32 %s119, 1
        %s206 = scalar_lea.sflag [#allocation3], %s205
        %s207 = sand.u32 %s119, 1
        %s208 = smul.addr %s207, 4
        %s209 = scalar_lea.vmem [#allocation2], %s208
        %p210 = scmp.lt.s32.totalorder %s22, 1
        %s211 = scalar_select %p210, %s22, 1
        %p212 = scmp.lt.s32.totalorder %s21, 0
        %s213 = scalar_select %p212, %s21, 0
        %s214 = sadd.s32 %s213, %s211
        %s215 = smul.addr %s214, 4
        %s216 = scalar_lea.vmem %s0, %s215
        %p217 = scmp.lt.s32.totalorder %s21, 0
        %s218 = scalar_select %p217, %s21, 0
        %s219 = smul.addr %s218, 4
        %s220 = scalar_lea.vmem %s1, %s219
        %p221 = scmp.lt.s32.totalorder %s21, 0
        %s222 = scalar_select %p221, %s21, 0
        %s223 = smul.addr %s222, 4
        %s224 = scalar_lea.vmem %s2, %s223
        %v225 = vld [vmem:[%s216] sm:$0xf]
        %vm226 = vcmask 125952
        %v227 = vsel %vm226, %v225, 0.0
        %228 = vadd.xlane.f32.xlu0 %v227
        %v229 = vpop.xlane.xlu0 %228
        %v230 = vmul.f32 %v229, 0.0625
        %v231 = vsub.f32 %v225, %v230
        %v232 = vmul.f32 %v231, %v231
        %v233 = vsel %vm226, %v232, 0.0
        %234 = vadd.xlane.f32.xlu0 %v233
        %v235 = vpop.xlane.xlu0 %234
        %v236 = vmul.f32 %v235, 0.0625
        %v237 = vld [vmem:[%s220] sm:$0xf]
        %v238 = vadd.f32 %v236, 1e-05
        %v239 = vrsqrt.pop %v238
        %v240 = vmul.f32 %v239, %v238
        %v241 = vmul.f32 %v240, %v239
        %v242 = vmul.f32 0.5, %v241
        %v243 = vsub.f32 1.5, %v242
        %v244 = vmul.f32 %v239, %v243
        %vm245 = vweird.f32 %v238
        %vm246 = vweird.f32 %v239
        %vm247 = vmor %vm245, %vm246
        %v248 = vsel %vm247, %v239, %v244
        %v249 = vmul.f32 %v237, %v248
        %251 = vset.pattern.permute.xlu0 0
        %252 = vperm.xlu0 %251, %v249
        %v253 = vpop.permute.xlu0 %252
        %v255 = vmul.f32 %v231, %v253
        %v256 = vld [vmem:[%s224] sm:$0xf]
        %258 = vset.pattern.permute.xlu0 0
        %259 = vperm.xlu0 %258, %v256
        %v260 = vpop.permute.xlu0 %259
        %v262 = vadd.f32 %v255, %v260
        %263 = vst.msk [vmem:[%s209] sm:$0xf] %vm226, %v262
        %s264 = sand.u32 %s119, 1
        %s265 = scalar_lea.sflag [#allocation3], %s264
        %s266 = sand.u32 %s119, 1
        %s267 = smul.addr %s266, 4
        %s268 = scalar_lea.vmem [#allocation2], %s267
        // Predicated region
        $region33: #{tpu_custom_call.1} parent=31 // pred_check
          %p269 = pneg %p129
        $region34: #{tpu_custom_call.1} parent=31 // pred_check_branch
          %271 = sbr.rel (%p269) target = $region36
        $region35: #{tpu_custom_call.1} parent=31 // pred_region
          %273 = vsyncadd %s265, 0
          %s274 = sadd.s32 %s21, %s22
          %s275 = smul.addr %s274, 4
          %s276 = scalar_lea.hbm %s3, %s275
          %s278 = sshll.u32 %s268, 4
          %s279 = int_to_ptr.vmem [resolvable:$true] %s278
          %s280 = sshll.u32 %s276, 4
          %s281 = int_to_ptr.hbm [resolvable:$true] %s280
          %283 = dma.vmem_to_hbm [thread:$0]  %s279, 64, %s281, %s265
        $region36: #{tpu_custom_call.1} parent=31 // pred_fallthru
          _
      $region32: #{tpu_custom_call.1} parent=5 // pred_fallthru
        _
      %p284 = scmp.le.s32.totalorder 2, %s12
      // Predicated region
      $region37: #{tpu_custom_call.1} parent=5 // pred_check
        %p285 = pneg %p284
      $region38: #{tpu_custom_call.1} parent=5 // pred_check_branch
        %287 = sbr.rel (%p285) target = $region40
      $region39: #{tpu_custom_call.1} parent=5 // pred_region
        %s288 = ssub.s32 %s12, 2
        // Predicated region
        $region41: #{tpu_custom_call.1} parent=39 // pred_check
          %p289 = pneg %p135
        $region42: #{tpu_custom_call.1} parent=39 // pred_check_branch
          %291 = sbr.rel (%p289) target = $region44
        $region43: #{tpu_custom_call.1} parent=39 // pred_region
          %s292 = sand.u32 %s120, 1
          %s293 = scalar_lea.sflag [#allocation3], %s292
          %s294 = sand.u32 %s120, 1
          %s295 = smul.addr %s294, 4
          %s296 = scalar_lea.vmem [#allocation2], %s295
          %298 = dma.done %s293, 64
        $region44: #{tpu_custom_call.1} parent=39 // pred_fallthru
          _
      $region40: #{tpu_custom_call.1} parent=5 // pred_fallthru
        _
    $region6: #{tpu_custom_call.1} parent=1 // loop_footer
      %s16 = sadd.s32 1, %s12
    $region7: #{tpu_custom_call.1} parent=1 // loop_footer_branch
      %11 = sbr.rel target = $region3
    $region8: #{tpu_custom_call.1} parent=1 // loop_exit
      _
    %299 = vsyncpa [#allocation3], 1
    %s300 = scalar_lea.sflag [#allocation3], 1
    %301 = vsyncpa %s300, 1

</llo_original>
